<compile_context>
chip_gen: v5e
topology: v5e:2x2
jax: 0.10.0
libtpu: 0.0.40
codegen_flags: <defaults>
</compile_context>

<pallas_src>
import functools

import jax
import jax.numpy as jnp
from jax import lax
from jax.experimental import pallas as pl
from jax.experimental.pallas import tpu as pltpu


_VMEM_TILE_BUDGET = 40 << 20   # working-set budget used to size the batch tile
_VMEM_LIMIT_CAP = 56 << 20     # never approach v7x's 64 MiB physical VMEM


def _round_up(x, m):
    return (x + m - 1) // m * m


def _pick_batch_tile(B, K_pad):
    """Largest legal batch-row tile whose double-buffered working set fits.

    Working set per grid step: (4 input + 4 output) activation blocks of
    (TB, K_pad) f32, double-buffered.  Returns (B_pad, TB) with TB == B_pad or
    TB a multiple of 8 that divides B_pad.
    """
    bytes_per_row = 2 * 8 * K_pad * 4
    cap = _VMEM_TILE_BUDGET // bytes_per_row
    cap = max(8, min(int(cap), 1024))          # diminishing returns past ~1K rows
    if B <= cap:
        return B, B                            # one full-batch tile
    b_pad = _round_up(B, 8)                    # explicit padding path
    tb = 8
    for cand in range(8, min(cap, b_pad) + 1, 8):
        if b_pad % cand == 0:
            tb = cand
    return b_pad, tb


# ----------------------------------------------------------------------------
# Pallas kernel: fused diagonal spectral complex multiply for BOTH corners.
#   activations: planar f32 (TB, K) blocks; weights: (1, K) broadcast over rows
#   (ar + i*ai) * (wr + i*wi) = (ar*wr - ai*wi) + i*(ar*wi + ai*wr)
# ----------------------------------------------------------------------------
def _spectral_mul_kernel(w1r_ref, w1i_ref, w2r_ref, w2i_ref,
                         tr_ref, ti_ref, br_ref, bi_ref,
                         otr_ref, oti_ref, obr_ref, obi_ref):
    w1r = w1r_ref[...]
    w1i = w1i_ref[...]
    w2r = w2r_ref[...]
    w2i = w2i_ref[...]

    tr = tr_ref[...]
    ti = ti_ref[...]
    otr_ref[...] = tr * w1r - ti * w1i
    oti_ref[...] = tr * w1i + ti * w1r

    br = br_ref[...]
    bi = bi_ref[...]
    obr_ref[...] = br * w2r - bi * w2i
    obi_ref[...] = br * w2i + bi * w2r


def fused_spectral_mul(tr, ti, br, bi, weights1, weights2):
    """tr/ti/br/bi: (B, K) f32 corner planes; weights: (C, m1, m2, 2) f32.

    Returns (out_top_re, out_top_im, out_bot_re, out_bot_im), each (B, K) f32.
    """
    B, K = tr.shape

    # Planar weight rows (tiny).  TODO(synk): hoist to parameter creation when
    # the layer is called many times per step.
    w1r = weights1[..., 0].reshape(1, K).astype(jnp.float32)
    w1i = weights1[..., 1].reshape(1, K).astype(jnp.float32)
    w2r = weights2[..., 0].reshape(1, K).astype(jnp.float32)
    w2i = weights2[..., 1].reshape(1, K).astype(jnp.float32)

    # Lane-dense K: pad to a multiple of 128 when needed (unmasked stores).
    K_pad = _round_up(K, 128)
    if K_pad != K:
        pk = ((0, 0), (0, K_pad - K))
        tr, ti, br, bi = [jnp.pad(a, pk) for a in (tr, ti, br, bi)]
        w1r, w1i, w2r, w2i = [jnp.pad(w, pk) for w in (w1r, w1i, w2r, w2i)]

    # Batch tile sized to the VMEM budget; pad B when no legal divisor exists.
    B_pad, TB = _pick_batch_tile(B, K_pad)
    if B_pad != B:
        pb = ((0, B_pad - B), (0, 0))
        tr, ti, br, bi = [jnp.pad(a, pb) for a in (tr, ti, br, bi)]
    n_b = B_pad // TB

    # Double-buffered working set (4 in + 4 out activation blocks + weights).
    ws = 2 * (8 * TB * K_pad + 4 * K_pad) * 4
    vmem_limit = int(min(_VMEM_LIMIT_CAP,
                         max(16 << 20, int(ws * 1.25) + (2 << 20))))

    cost = pl.CostEstimate(
        flops=12 * B_pad * K_pad,                       # 6 flops / complex elem
        transcendentals=0,
        bytes_accessed=4 * (8 * B_pad * K_pad + 4 * K_pad),
    )

    act_spec = pl.BlockSpec((TB, K_pad), lambda b: (b, 0))
    w_spec = pl.BlockSpec((1, K_pad), lambda b: (0, 0))

    outs = pl.pallas_call(
        _spectral_mul_kernel,
        out_shape=tuple(jax.ShapeDtypeStruct((B_pad, K_pad), jnp.float32)
                        for _ in range(4)),
        grid=(n_b,),
        in_specs=[w_spec] * 4 + [act_spec] * 4,
        out_specs=(act_spec,) * 4,
        compiler_params=pltpu.CompilerParams(
            dimension_semantics=("parallel",),
            vmem_limit_bytes=vmem_limit,
        ),
        cost_estimate=cost,
    )(w1r, w1i, w2r, w2i, tr, ti, br, bi)

    if (B_pad, K_pad) != (B, K):
        outs = tuple(o[:B, :K] for o in outs)
    return outs


# ----------------------------------------------------------------------------
# FourierLayer forward: rfft2 -> truncate modes -> spectral mul -> irfft2
# ----------------------------------------------------------------------------
def fourier_layer(x, weights1, weights2, modes1, modes2):
    """x: (B, C, H, W) f32;  weights1/2: (C, modes1, modes2, 2) f32."""
    B, C, H, W = x.shape
    assert 2 * modes1 <= H, "top/bottom mode blocks would overlap"
    Wf = W // 2 + 1
    assert modes2 <= Wf

    # TODO(synk): rfftn/irfftn have no Pallas/TPU primitive; they stay in XLA.
    x_ft = jnp.fft.rfftn(x, axes=(-2, -1))                     # (B,C,H,Wf) c64

    K = C * modes1 * modes2
    top = x_ft[:, :, :modes1, :modes2]                         # (B,C,m1,m2)
    bot = x_ft[:, :, H - modes1:, :modes2]

    # Planar f32 corner planes; each slice+real/imag+reshape fuses into a
    # single producer copy (no stacked slabs, no extra HBM round trips).
    tr = jnp.real(top).reshape(B, K).astype(jnp.float32)
    ti = jnp.imag(top).reshape(B, K).astype(jnp.float32)
    br = jnp.real(bot).reshape(B, K).astype(jnp.float32)
    bi = jnp.imag(bot).reshape(B, K).astype(jnp.float32)

    otr, oti, obr, obi = fused_spectral_mul(tr, ti, br, bi, weights1, weights2)

    out_top = lax.complex(otr, oti).reshape(B, C, modes1, modes2)
    out_bot = lax.complex(obr, obi).reshape(B, C, modes1, modes2)

    # Assemble the full spectrum with one concat + one pad (no full-size
    # .at[].set scatters); the lax.complex above fuses into this consumer.
    mid = jnp.zeros((B, C, H - 2 * modes1, modes2), dtype=out_top.dtype)
    rows = jnp.concatenate([out_top, mid, out_bot], axis=2)    # (B,C,H,m2)
    out_ft = jnp.pad(rows, ((0, 0), (0, 0), (0, 0), (0, Wf - modes2)))

    y = jnp.fft.irfftn(out_ft, s=(H, W), axes=(-2, -1))
    return y.astype(jnp.float32)


if __name__ == "__main__":
    # Small shapes consistent with the module: x is (batch, width, H, W).
    B, width = 2, 32
    H = W = 16
    modes1 = modes2 = 4

    key = jax.random.PRNGKey(0)
    kx, k1, k2 = jax.random.split(key, 3)

    scale = 1.0 / (width * width)
    w1 = scale * jax.random.uniform(k1, (width, modes1, modes2, 2), jnp.float32)
    w2 = scale * jax.random.uniform(k2, (width, modes1, modes2, 2), jnp.float32)
    x = jax.random.normal(kx, (B, width, H, W), jnp.float32)

    fwd = jax.jit(functools.partial(fourier_layer, modes1=modes1, modes2=modes2))
    out = jax.block_until_ready(fwd(x, w1, w2))

    assert out.shape == (B, width, H, W), out.shape
    assert out.dtype == jnp.float32
    assert bool(jnp.all(jnp.isfinite(out)))

    # Pure-JAX reference (same diagonal spectral-multiply interpretation).
    wc1 = lax.complex(w1[..., 0], w1[..., 1])
    wc2 = lax.complex(w2[..., 0], w2[..., 1])
    x_ft = jnp.fft.rfftn(x, axes=(-2, -1))
    ref_ft = jnp.zeros_like(x_ft)
    ref_ft = ref_ft.at[:, :, :modes1, :modes2].set(
        x_ft[:, :, :modes1, :modes2] * wc1[None])
    ref_ft = ref_ft.at[:, :, H - modes1:, :modes2].set(
        x_ft[:, :, H - modes1:, :modes2] * wc2[None])
    ref = jnp.fft.irfftn(ref_ft, s=(H, W), axes=(-2, -1)).astype(jnp.float32)
    err = float(jnp.max(jnp.abs(out - ref)))
    assert err < 1e-4, err

    print("KERNEL_OK")
</pallas_src>

<mosaic_0001>
module attributes {stable_mosaic.version = 11 : i64} {
  func.func @_spectral_mul_kernel(%arg0: i32, %arg1: memref<1x512xf32, #tpu.memory_space<vmem>>, %arg2: memref<1x512xf32, #tpu.memory_space<vmem>>, %arg3: memref<1x512xf32, #tpu.memory_space<vmem>>, %arg4: memref<1x512xf32, #tpu.memory_space<vmem>>, %arg5: memref<2x512xf32, #tpu.memory_space<vmem>>, %arg6: memref<2x512xf32, #tpu.memory_space<vmem>>, %arg7: memref<2x512xf32, #tpu.memory_space<vmem>>, %arg8: memref<2x512xf32, #tpu.memory_space<vmem>>, %arg9: memref<2x512xf32, #tpu.memory_space<vmem>>, %arg10: memref<2x512xf32, #tpu.memory_space<vmem>>, %arg11: memref<2x512xf32, #tpu.memory_space<vmem>>, %arg12: memref<2x512xf32, #tpu.memory_space<vmem>>) attributes {dimension_semantics = [#tpu.dimension_semantics<parallel>], iteration_bounds = array<i64: 1>, scalar_prefetch = 0 : i64, scratch_operands = 0 : i64, tpu.core_type = #tpu.core_type<tc>, window_params = [{pipeline_mode = #tpu.pipeline_mode<synchronous>, transform_indices = @transform_0, window_bounds = array<i64: 1, 512>}, {pipeline_mode = #tpu.pipeline_mode<synchronous>, transform_indices = @transform_1, window_bounds = array<i64: 1, 512>}, {pipeline_mode = #tpu.pipeline_mode<synchronous>, transform_indices = @transform_2, window_bounds = array<i64: 1, 512>}, {pipeline_mode = #tpu.pipeline_mode<synchronous>, transform_indices = @transform_3, window_bounds = array<i64: 1, 512>}, {transform_indices = @transform_4, window_bounds = array<i64: 2, 512>}, {transform_indices = @transform_5, window_bounds = array<i64: 2, 512>}, {transform_indices = @transform_6, window_bounds = array<i64: 2, 512>}, {transform_indices = @transform_7, window_bounds = array<i64: 2, 512>}, {transform_indices = @transform_8, window_bounds = array<i64: 2, 512>}, {transform_indices = @transform_9, window_bounds = array<i64: 2, 512>}, {transform_indices = @transform_10, window_bounds = array<i64: 2, 512>}, {transform_indices = @transform_11, window_bounds = array<i64: 2, 512>}]} {
    %c0 = arith.constant 0 : index
    %c0_0 = arith.constant 0 : index
    %0 = vector.load %arg1[%c0, %c0_0] : memref<1x512xf32, #tpu.memory_space<vmem>>, vector<1x512xf32>
    %c0_1 = arith.constant 0 : index
    %c0_2 = arith.constant 0 : index
    %1 = vector.load %arg2[%c0_1, %c0_2] : memref<1x512xf32, #tpu.memory_space<vmem>>, vector<1x512xf32>
    %c0_3 = arith.constant 0 : index
    %c0_4 = arith.constant 0 : index
    %2 = vector.load %arg3[%c0_3, %c0_4] : memref<1x512xf32, #tpu.memory_space<vmem>>, vector<1x512xf32>
    %c0_5 = arith.constant 0 : index
    %c0_6 = arith.constant 0 : index
    %3 = vector.load %arg4[%c0_5, %c0_6] : memref<1x512xf32, #tpu.memory_space<vmem>>, vector<1x512xf32>
    %c0_7 = arith.constant 0 : index
    %c0_8 = arith.constant 0 : index
    %4 = vector.load %arg5[%c0_7, %c0_8] : memref<2x512xf32, #tpu.memory_space<vmem>>, vector<2x512xf32>
    %c0_9 = arith.constant 0 : index
    %c0_10 = arith.constant 0 : index
    %5 = vector.load %arg6[%c0_9, %c0_10] : memref<2x512xf32, #tpu.memory_space<vmem>>, vector<2x512xf32>
    %6 = vector.broadcast %0 : vector<1x512xf32> to vector<2x512xf32>
    %7 = arith.mulf %4, %6 : vector<2x512xf32>
    %8 = vector.broadcast %1 : vector<1x512xf32> to vector<2x512xf32>
    %9 = arith.mulf %5, %8 : vector<2x512xf32>
    %10 = arith.subf %7, %9 : vector<2x512xf32>
    %c0_11 = arith.constant 0 : index
    %c0_12 = arith.constant 0 : index
    %11 = vector.load %arg9[%c0_11, %c0_12] : memref<2x512xf32, #tpu.memory_space<vmem>>, vector<2x512xf32>
    tpu.vector_store %arg9[%c0_11, %c0_12], %10 {strides = array<i32>} : memref<2x512xf32, #tpu.memory_space<vmem>>, vector<2x512xf32>,
    %12 = vector.broadcast %1 : vector<1x512xf32> to vector<2x512xf32>
    %13 = arith.mulf %4, %12 : vector<2x512xf32>
    %14 = vector.broadcast %0 : vector<1x512xf32> to vector<2x512xf32>
    %15 = arith.mulf %5, %14 : vector<2x512xf32>
    %16 = arith.addf %13, %15 : vector<2x512xf32>
    %c0_13 = arith.constant 0 : index
    %c0_14 = arith.constant 0 : index
    %17 = vector.load %arg10[%c0_13, %c0_14] : memref<2x512xf32, #tpu.memory_space<vmem>>, vector<2x512xf32>
    tpu.vector_store %arg10[%c0_13, %c0_14], %16 {strides = array<i32>} : memref<2x512xf32, #tpu.memory_space<vmem>>, vector<2x512xf32>,
    %c0_15 = arith.constant 0 : index
    %c0_16 = arith.constant 0 : index
    %18 = vector.load %arg7[%c0_15, %c0_16] : memref<2x512xf32, #tpu.memory_space<vmem>>, vector<2x512xf32>
    %c0_17 = arith.constant 0 : index
    %c0_18 = arith.constant 0 : index
    %19 = vector.load %arg8[%c0_17, %c0_18] : memref<2x512xf32, #tpu.memory_space<vmem>>, vector<2x512xf32>
    %20 = vector.broadcast %2 : vector<1x512xf32> to vector<2x512xf32>
    %21 = arith.mulf %18, %20 : vector<2x512xf32>
    %22 = vector.broadcast %3 : vector<1x512xf32> to vector<2x512xf32>
    %23 = arith.mulf %19, %22 : vector<2x512xf32>
    %24 = arith.subf %21, %23 : vector<2x512xf32>
    %c0_19 = arith.constant 0 : index
    %c0_20 = arith.constant 0 : index
    %25 = vector.load %arg11[%c0_19, %c0_20] : memref<2x512xf32, #tpu.memory_space<vmem>>, vector<2x512xf32>
    tpu.vector_store %arg11[%c0_19, %c0_20], %24 {strides = array<i32>} : memref<2x512xf32, #tpu.memory_space<vmem>>, vector<2x512xf32>,
    %26 = vector.broadcast %3 : vector<1x512xf32> to vector<2x512xf32>
    %27 = arith.mulf %18, %26 : vector<2x512xf32>
    %28 = vector.broadcast %2 : vector<1x512xf32> to vector<2x512xf32>
    %29 = arith.mulf %19, %28 : vector<2x512xf32>
    %30 = arith.addf %27, %29 : vector<2x512xf32>
    %c0_21 = arith.constant 0 : index
    %c0_22 = arith.constant 0 : index
    %31 = vector.load %arg12[%c0_21, %c0_22] : memref<2x512xf32, #tpu.memory_space<vmem>>, vector<2x512xf32>
    tpu.vector_store %arg12[%c0_21, %c0_22], %30 {strides = array<i32>} : memref<2x512xf32, #tpu.memory_space<vmem>>, vector<2x512xf32>,
    return
  }
  func.func @transform_0(%arg0: i32) -> (i32, i32) {
    %c0_i32 = arith.constant 0 : i32
    %c0_i32_0 = arith.constant 0 : i32
    %c0_i32_1 = arith.constant 0 : i32
    return %c0_i32, %c0_i32_0 : i32, i32
  }
  func.func @transform_1(%arg0: i32) -> (i32, i32) {
    %c0_i32 = arith.constant 0 : i32
    %c0_i32_0 = arith.constant 0 : i32
    %c0_i32_1 = arith.constant 0 : i32
    return %c0_i32, %c0_i32_0 : i32, i32
  }
  func.func @transform_2(%arg0: i32) -> (i32, i32) {
    %c0_i32 = arith.constant 0 : i32
    %c0_i32_0 = arith.constant 0 : i32
    %c0_i32_1 = arith.constant 0 : i32
    return %c0_i32, %c0_i32_0 : i32, i32
  }
  func.func @transform_3(%arg0: i32) -> (i32, i32) {
    %c0_i32 = arith.constant 0 : i32
    %c0_i32_0 = arith.constant 0 : i32
    %c0_i32_1 = arith.constant 0 : i32
    return %c0_i32, %c0_i32_0 : i32, i32
  }
  func.func @transform_4(%arg0: i32) -> (i32, i32) {
    %c0_i32 = arith.constant 0 : i32
    %c0_i32_0 = arith.constant 0 : i32
    return %arg0, %c0_i32 : i32, i32
  }
  func.func @transform_5(%arg0: i32) -> (i32, i32) {
    %c0_i32 = arith.constant 0 : i32
    %c0_i32_0 = arith.constant 0 : i32
    return %arg0, %c0_i32 : i32, i32
  }
  func.func @transform_6(%arg0: i32) -> (i32, i32) {
    %c0_i32 = arith.constant 0 : i32
    %c0_i32_0 = arith.constant 0 : i32
    return %arg0, %c0_i32 : i32, i32
  }
  func.func @transform_7(%arg0: i32) -> (i32, i32) {
    %c0_i32 = arith.constant 0 : i32
    %c0_i32_0 = arith.constant 0 : i32
    return %arg0, %c0_i32 : i32, i32
  }
  func.func @transform_8(%arg0: i32) -> (i32, i32) {
    %c0_i32 = arith.constant 0 : i32
    %c0_i32_0 = arith.constant 0 : i32
    return %arg0, %c0_i32 : i32, i32
  }
  func.func @transform_9(%arg0: i32) -> (i32, i32) {
    %c0_i32 = arith.constant 0 : i32
    %c0_i32_0 = arith.constant 0 : i32
    return %arg0, %c0_i32 : i32, i32
  }
  func.func @transform_10(%arg0: i32) -> (i32, i32) {
    %c0_i32 = arith.constant 0 : i32
    %c0_i32_0 = arith.constant 0 : i32
    return %arg0, %c0_i32 : i32, i32
  }
  func.func @transform_11(%arg0: i32) -> (i32, i32) {
    %c0_i32 = arith.constant 0 : i32
    %c0_i32_0 = arith.constant 0 : i32
    return %arg0, %c0_i32 : i32, i32
  }
}

</mosaic_0001>

<llo_original>
// kernel: squeeze.4
$region0: #{squeeze.4}
  %s0 = inlined_call_operand.vmem [shape: f32[32,4,4,1], index: 0, kind: input, shape index: {}]
  %s1 = inlined_call_operand.vmem [shape: f32[1,512], index: 1, kind: output, shape index: {}]
  $region1: #{squeeze.4} parent=0
    #allocation0 [shape = 'u8[16384]{0}', space=vmem, size = 0x4000, scoped, tag = 'scoped mem for output reshape']
    #allocation1 [shape = 'u8[131072]{0}', space=vmem, size = 0x20000, scoped, tag = 'scoped mem for input reshape']
    %s3 = ssub.s32 16, 1
    %s4 = scalar_lea.vmem %s0, 124
    %v5 = vld [vmem:[%s4] sm:%s3]
    %s6 = scalar_lea.vmem [#allocation1], 248
    %7 = vst [vmem:[%s6] sm:%s3] %v5
    %s8 = scalar_lea.vmem %s0, 120
    %v9 = vld [vmem:[%s8] sm:%s3]
    %s10 = scalar_lea.vmem [#allocation1], 240
    %11 = vst [vmem:[%s10] sm:%s3] %v9
    %s12 = scalar_lea.vmem %s0, 116
    %v13 = vld [vmem:[%s12] sm:%s3]
    %s14 = scalar_lea.vmem [#allocation1], 232
    %15 = vst [vmem:[%s14] sm:%s3] %v13
    %s16 = scalar_lea.vmem %s0, 112
    %v17 = vld [vmem:[%s16] sm:%s3]
    %s18 = scalar_lea.vmem [#allocation1], 224
    %19 = vst [vmem:[%s18] sm:%s3] %v17
    %s20 = scalar_lea.vmem %s0, 108
    %v21 = vld [vmem:[%s20] sm:%s3]
    %s22 = scalar_lea.vmem [#allocation1], 216
    %23 = vst [vmem:[%s22] sm:%s3] %v21
    %s24 = scalar_lea.vmem %s0, 104
    %v25 = vld [vmem:[%s24] sm:%s3]
    %s26 = scalar_lea.vmem [#allocation1], 208
    %27 = vst [vmem:[%s26] sm:%s3] %v25
    %s28 = scalar_lea.vmem %s0, 100
    %v29 = vld [vmem:[%s28] sm:%s3]
    %s30 = scalar_lea.vmem [#allocation1], 200
    %31 = vst [vmem:[%s30] sm:%s3] %v29
    %s32 = scalar_lea.vmem %s0, 96
    %v33 = vld [vmem:[%s32] sm:%s3]
    %s34 = scalar_lea.vmem [#allocation1], 192
    %35 = vst [vmem:[%s34] sm:%s3] %v33
    %s36 = scalar_lea.vmem %s0, 92
    %v37 = vld [vmem:[%s36] sm:%s3]
    %s38 = scalar_lea.vmem [#allocation1], 184
    %39 = vst [vmem:[%s38] sm:%s3] %v37
    %s40 = scalar_lea.vmem %s0, 88
    %v41 = vld [vmem:[%s40] sm:%s3]
    %s42 = scalar_lea.vmem [#allocation1], 176
    %43 = vst [vmem:[%s42] sm:%s3] %v41
    %s44 = scalar_lea.vmem %s0, 84
    %v45 = vld [vmem:[%s44] sm:%s3]
    %s46 = scalar_lea.vmem [#allocation1], 168
    %47 = vst [vmem:[%s46] sm:%s3] %v45
    %s48 = scalar_lea.vmem %s0, 80
    %v49 = vld [vmem:[%s48] sm:%s3]
    %s50 = scalar_lea.vmem [#allocation1], 160
    %51 = vst [vmem:[%s50] sm:%s3] %v49
    %s52 = scalar_lea.vmem %s0, 76
    %v53 = vld [vmem:[%s52] sm:%s3]
    %s54 = scalar_lea.vmem [#allocation1], 152
    %55 = vst [vmem:[%s54] sm:%s3] %v53
    %s56 = scalar_lea.vmem %s0, 72
    %v57 = vld [vmem:[%s56] sm:%s3]
    %s58 = scalar_lea.vmem [#allocation1], 144
    %59 = vst [vmem:[%s58] sm:%s3] %v57
    %s60 = scalar_lea.vmem %s0, 68
    %v61 = vld [vmem:[%s60] sm:%s3]
    %s62 = scalar_lea.vmem [#allocation1], 136
    %63 = vst [vmem:[%s62] sm:%s3] %v61
    %s64 = scalar_lea.vmem %s0, 64
    %v65 = vld [vmem:[%s64] sm:%s3]
    %s66 = scalar_lea.vmem [#allocation1], 128
    %67 = vst [vmem:[%s66] sm:%s3] %v65
    %s68 = scalar_lea.vmem %s0, 60
    %v69 = vld [vmem:[%s68] sm:%s3]
    %s70 = scalar_lea.vmem [#allocation1], 120
    %71 = vst [vmem:[%s70] sm:%s3] %v69
    %s72 = scalar_lea.vmem %s0, 56
    %v73 = vld [vmem:[%s72] sm:%s3]
    %s74 = scalar_lea.vmem [#allocation1], 112
    %75 = vst [vmem:[%s74] sm:%s3] %v73
    %s76 = scalar_lea.vmem %s0, 52
    %v77 = vld [vmem:[%s76] sm:%s3]
    %s78 = scalar_lea.vmem [#allocation1], 104
    %79 = vst [vmem:[%s78] sm:%s3] %v77
    %s80 = scalar_lea.vmem %s0, 48
    %v81 = vld [vmem:[%s80] sm:%s3]
    %s82 = scalar_lea.vmem [#allocation1], 96
    %83 = vst [vmem:[%s82] sm:%s3] %v81
    %s84 = scalar_lea.vmem %s0, 44
    %v85 = vld [vmem:[%s84] sm:%s3]
    %s86 = scalar_lea.vmem [#allocation1], 88
    %87 = vst [vmem:[%s86] sm:%s3] %v85
    %s88 = scalar_lea.vmem %s0, 40
    %v89 = vld [vmem:[%s88] sm:%s3]
    %s90 = scalar_lea.vmem [#allocation1], 80
    %91 = vst [vmem:[%s90] sm:%s3] %v89
    %s92 = scalar_lea.vmem %s0, 36
    %v93 = vld [vmem:[%s92] sm:%s3]
    %s94 = scalar_lea.vmem [#allocation1], 72
    %95 = vst [vmem:[%s94] sm:%s3] %v93
    %s96 = scalar_lea.vmem %s0, 32
    %v97 = vld [vmem:[%s96] sm:%s3]
    %s98 = scalar_lea.vmem [#allocation1], 64
    %99 = vst [vmem:[%s98] sm:%s3] %v97
    %s100 = scalar_lea.vmem %s0, 28
    %v101 = vld [vmem:[%s100] sm:%s3]
    %s102 = scalar_lea.vmem [#allocation1], 56
    %103 = vst [vmem:[%s102] sm:%s3] %v101
    %s104 = scalar_lea.vmem %s0, 24
    %v105 = vld [vmem:[%s104] sm:%s3]
    %s106 = scalar_lea.vmem [#allocation1], 48
    %107 = vst [vmem:[%s106] sm:%s3] %v105
    %s108 = scalar_lea.vmem %s0, 20
    %v109 = vld [vmem:[%s108] sm:%s3]
    %s110 = scalar_lea.vmem [#allocation1], 40
    %111 = vst [vmem:[%s110] sm:%s3] %v109
    %s112 = scalar_lea.vmem %s0, 16
    %v113 = vld [vmem:[%s112] sm:%s3]
    %s114 = scalar_lea.vmem [#allocation1], 32
    %115 = vst [vmem:[%s114] sm:%s3] %v113
    %s116 = scalar_lea.vmem %s0, 12
    %v117 = vld [vmem:[%s116] sm:%s3]
    %s118 = scalar_lea.vmem [#allocation1], 24
    %119 = vst [vmem:[%s118] sm:%s3] %v117
    %s120 = scalar_lea.vmem %s0, 8
    %v121 = vld [vmem:[%s120] sm:%s3]
    %s122 = scalar_lea.vmem [#allocation1], 16
    %123 = vst [vmem:[%s122] sm:%s3] %v121
    %s124 = scalar_lea.vmem %s0, 4
    %v125 = vld [vmem:[%s124] sm:%s3]
    %s126 = scalar_lea.vmem [#allocation1], 8
    %127 = vst [vmem:[%s126] sm:%s3] %v125
    %v128 = vld [vmem:[%s0] sm:%s3]
    %129 = vst [vmem:[#allocation1] sm:%s3] %v128
    %v130 = vld [vmem:[#allocation1] sm:$0x1]
    %s131 = scalar_lea.vmem [#allocation1], 63
    %v132 = vld [vmem:[%s131] sm:$0x2]
    %vm133 = vcmask 1041409
    %v134 = vsel %vm133, %v132, %v130
    %s135 = scalar_lea.vmem [#allocation1], 126
    %v136 = vld [vmem:[%s135] sm:$0x4]
    %vm137 = vcmask 1042434
    %v138 = vsel %vm137, %v136, %v134
    %s139 = scalar_lea.vmem [#allocation1], 189
    %v140 = vld [vmem:[%s139] sm:$0x8]
    %vm141 = vcmask 1043459
    %v142 = vsel %vm141, %v140, %v138
    %vm143 = vcmask 31744
    %144 = vst.msk [vmem:[#allocation0] ss:$8 sm:$0xf] %vm143, %v142
    %s145 = scalar_lea.vmem [#allocation1], 59
    %v146 = vld [vmem:[%s145] sm:$0x1]
    %s147 = scalar_lea.vmem [#allocation1], 122
    %v148 = vld [vmem:[%s147] sm:$0x2]
    %vm149 = vcmask 1041409
    %v150 = vsel %vm149, %v148, %v146
    %s151 = scalar_lea.vmem [#allocation1], 185
    %v152 = vld [vmem:[%s151] sm:$0x4]
    %vm153 = vcmask 1042434
    %v154 = vsel %vm153, %v152, %v150
    %s155 = scalar_lea.vmem [#allocation1], 248
    %v156 = vld [vmem:[%s155] sm:$0x8]
    %vm157 = vcmask 1043459
    %v158 = vsel %vm157, %v156, %v154
    %159 = vrot.lane.b32.xlu0 %v158, 124
    %v160 = vpop.permute.xlu0 %159
    %vm161 = vcmask 1048544
    %162 = vst.msk [vmem:[#allocation0] ss:$8 sm:$0xf] %vm161, %v160
    %s163 = scalar_lea.vmem [#allocation1], 58
    %v164 = vld [vmem:[%s163] sm:$0x1]
    %s165 = scalar_lea.vmem [#allocation1], 121
    %v166 = vld [vmem:[%s165] sm:$0x2]
    %vm167 = vcmask 1041409
    %v168 = vsel %vm167, %v166, %v164
    %s169 = scalar_lea.vmem [#allocation1], 184
    %v170 = vld [vmem:[%s169] sm:$0x4]
    %vm171 = vcmask 1042434
    %v172 = vsel %vm171, %v170, %v168
    %s173 = scalar_lea.vmem [#allocation1], 247
    %v174 = vld [vmem:[%s173] sm:$0x8]
    %vm175 = vcmask 1043459
    %v176 = vsel %vm175, %v174, %v172
    %177 = vrot.lane.b32.xlu0 %v176, 120
    %v178 = vpop.permute.xlu0 %177
    %vm179 = vcmask 1015744
    %180 = vst.msk [vmem:[#allocation0] ss:$8 sm:$0xf] %vm179, %v178
    %s181 = scalar_lea.vmem [#allocation1], 57
    %v182 = vld [vmem:[%s181] sm:$0x1]
    %s183 = scalar_lea.vmem [#allocation1], 120
    %v184 = vld [vmem:[%s183] sm:$0x2]
    %vm185 = vcmask 1041409
    %v186 = vsel %vm185, %v184, %v182
    %s187 = scalar_lea.vmem [#allocation1], 183
    %v188 = vld [vmem:[%s187] sm:$0x4]
    %vm189 = vcmask 1042434
    %v190 = vsel %vm189, %v188, %v186
    %s191 = scalar_lea.vmem [#allocation1], 246
    %v192 = vld [vmem:[%s191] sm:$0x8]
    %vm193 = vcmask 1043459
    %v194 = vsel %vm193, %v192, %v190
    %195 = vrot.lane.b32.xlu0 %v194, 116
    %v196 = vpop.permute.xlu0 %195
    %vm197 = vcmask 982944
    %198 = vst.msk [vmem:[#allocation0] ss:$8 sm:$0xf] %vm197, %v196
    %s199 = scalar_lea.vmem [#allocation1], 56
    %v200 = vld [vmem:[%s199] sm:$0x1]
    %s201 = scalar_lea.vmem [#allocation1], 119
    %v202 = vld [vmem:[%s201] sm:$0x2]
    %vm203 = vcmask 1041409
    %v204 = vsel %vm203, %v202, %v200
    %s205 = scalar_lea.vmem [#allocation1], 182
    %v206 = vld [vmem:[%s205] sm:$0x4]
    %vm207 = vcmask 1042434
    %v208 = vsel %vm207, %v206, %v204
    %s209 = scalar_lea.vmem [#allocation1], 245
    %v210 = vld [vmem:[%s209] sm:$0x8]
    %vm211 = vcmask 1043459
    %v212 = vsel %vm211, %v210, %v208
    %213 = vrot.lane.b32.xlu0 %v212, 112
    %v214 = vpop.permute.xlu0 %213
    %vm215 = vcmask 950144
    %216 = vst.msk [vmem:[#allocation0] ss:$8 sm:$0xf] %vm215, %v214
    %s217 = scalar_lea.vmem [#allocation1], 51
    %v218 = vld [vmem:[%s217] sm:$0x1]
    %s219 = scalar_lea.vmem [#allocation1], 114
    %v220 = vld [vmem:[%s219] sm:$0x2]
    %vm221 = vcmask 1041409
    %v222 = vsel %vm221, %v220, %v218
    %s223 = scalar_lea.vmem [#allocation1], 177
    %v224 = vld [vmem:[%s223] sm:$0x4]
    %vm225 = vcmask 1042434
    %v226 = vsel %vm225, %v224, %v222
    %s227 = scalar_lea.vmem [#allocation1], 240
    %v228 = vld [vmem:[%s227] sm:$0x8]
    %vm229 = vcmask 1043459
    %v230 = vsel %vm229, %v228, %v226
    %231 = vrot.lane.b32.xlu0 %v230, 108
    %v232 = vpop.permute.xlu0 %231
    %vm233 = vcmask 917344
    %234 = vst.msk [vmem:[#allocation0] ss:$8 sm:$0xf] %vm233, %v232
    %s235 = scalar_lea.vmem [#allocation1], 50
    %v236 = vld [vmem:[%s235] sm:$0x1]
    %s237 = scalar_lea.vmem [#allocation1], 113
    %v238 = vld [vmem:[%s237] sm:$0x2]
    %vm239 = vcmask 1041409
    %v240 = vsel %vm239, %v238, %v236
    %s241 = scalar_lea.vmem [#allocation1], 176
    %v242 = vld [vmem:[%s241] sm:$0x4]
    %vm243 = vcmask 1042434
    %v244 = vsel %vm243, %v242, %v240
    %s245 = scalar_lea.vmem [#allocation1], 239
    %v246 = vld [vmem:[%s245] sm:$0x8]
    %vm247 = vcmask 1043459
    %v248 = vsel %vm247, %v246, %v244
    %249 = vrot.lane.b32.xlu0 %v248, 104
    %v250 = vpop.permute.xlu0 %249
    %vm251 = vcmask 884544
    %252 = vst.msk [vmem:[#allocation0] ss:$8 sm:$0xf] %vm251, %v250
    %s253 = scalar_lea.vmem [#allocation1], 49
    %v254 = vld [vmem:[%s253] sm:$0x1]
    %s255 = scalar_lea.vmem [#allocation1], 112
    %v256 = vld [vmem:[%s255] sm:$0x2]
    %vm257 = vcmask 1041409
    %v258 = vsel %vm257, %v256, %v254
    %s259 = scalar_lea.vmem [#allocation1], 175
    %v260 = vld [vmem:[%s259] sm:$0x4]
    %vm261 = vcmask 1042434
    %v262 = vsel %vm261, %v260, %v258
    %s263 = scalar_lea.vmem [#allocation1], 238
    %v264 = vld [vmem:[%s263] sm:$0x8]
    %vm265 = vcmask 1043459
    %v266 = vsel %vm265, %v264, %v262
    %267 = vrot.lane.b32.xlu0 %v266, 100
    %v268 = vpop.permute.xlu0 %267
    %vm269 = vcmask 851744
    %270 = vst.msk [vmem:[#allocation0] ss:$8 sm:$0xf] %vm269, %v268
    %s271 = scalar_lea.vmem [#allocation1], 48
    %v272 = vld [vmem:[%s271] sm:$0x1]
    %s273 = scalar_lea.vmem [#allocation1], 111
    %v274 = vld [vmem:[%s273] sm:$0x2]
    %vm275 = vcmask 1041409
    %v276 = vsel %vm275, %v274, %v272
    %s277 = scalar_lea.vmem [#allocation1], 174
    %v278 = vld [vmem:[%s277] sm:$0x4]
    %vm279 = vcmask 1042434
    %v280 = vsel %vm279, %v278, %v276
    %s281 = scalar_lea.vmem [#allocation1], 237
    %v282 = vld [vmem:[%s281] sm:$0x8]
    %vm283 = vcmask 1043459
    %v284 = vsel %vm283, %v282, %v280
    %285 = vrot.lane.b32.xlu0 %v284, 96
    %v286 = vpop.permute.xlu0 %285
    %vm287 = vcmask 818944
    %288 = vst.msk [vmem:[#allocation0] ss:$8 sm:$0xf] %vm287, %v286
    %s289 = scalar_lea.vmem [#allocation1], 43
    %v290 = vld [vmem:[%s289] sm:$0x1]
    %s291 = scalar_lea.vmem [#allocation1], 106
    %v292 = vld [vmem:[%s291] sm:$0x2]
    %vm293 = vcmask 1041409
    %v294 = vsel %vm293, %v292, %v290
    %s295 = scalar_lea.vmem [#allocation1], 169
    %v296 = vld [vmem:[%s295] sm:$0x4]
    %vm297 = vcmask 1042434
    %v298 = vsel %vm297, %v296, %v294
    %s299 = scalar_lea.vmem [#allocation1], 232
    %v300 = vld [vmem:[%s299] sm:$0x8]
    %vm301 = vcmask 1043459
    %v302 = vsel %vm301, %v300, %v298
    %303 = vrot.lane.b32.xlu0 %v302, 92
    %v304 = vpop.permute.xlu0 %303
    %vm305 = vcmask 786144
    %306 = vst.msk [vmem:[#allocation0] ss:$8 sm:$0xf] %vm305, %v304
    %s307 = scalar_lea.vmem [#allocation1], 42
    %v308 = vld [vmem:[%s307] sm:$0x1]
    %s309 = scalar_lea.vmem [#allocation1], 105
    %v310 = vld [vmem:[%s309] sm:$0x2]
    %vm311 = vcmask 1041409
    %v312 = vsel %vm311, %v310, %v308
    %s313 = scalar_lea.vmem [#allocation1], 168
    %v314 = vld [vmem:[%s313] sm:$0x4]
    %vm315 = vcmask 1042434
    %v316 = vsel %vm315, %v314, %v312
    %s317 = scalar_lea.vmem [#allocation1], 231
    %v318 = vld [vmem:[%s317] sm:$0x8]
    %vm319 = vcmask 1043459
    %v320 = vsel %vm319, %v318, %v316
    %321 = vrot.lane.b32.xlu0 %v320, 88
    %v322 = vpop.permute.xlu0 %321
    %vm323 = vcmask 753344
    %324 = vst.msk [vmem:[#allocation0] ss:$8 sm:$0xf] %vm323, %v322
    %s325 = scalar_lea.vmem [#allocation1], 41
    %v326 = vld [vmem:[%s325] sm:$0x1]
    %s327 = scalar_lea.vmem [#allocation1], 104
    %v328 = vld [vmem:[%s327] sm:$0x2]
    %vm329 = vcmask 1041409
    %v330 = vsel %vm329, %v328, %v326
    %s331 = scalar_lea.vmem [#allocation1], 167
    %v332 = vld [vmem:[%s331] sm:$0x4]
    %vm333 = vcmask 1042434
    %v334 = vsel %vm333, %v332, %v330
    %s335 = scalar_lea.vmem [#allocation1], 230
    %v336 = vld [vmem:[%s335] sm:$0x8]
    %vm337 = vcmask 1043459
    %v338 = vsel %vm337, %v336, %v334
    %339 = vrot.lane.b32.xlu0 %v338, 84
    %v340 = vpop.permute.xlu0 %339
    %vm341 = vcmask 720544
    %342 = vst.msk [vmem:[#allocation0] ss:$8 sm:$0xf] %vm341, %v340
    %s343 = scalar_lea.vmem [#allocation1], 40
    %v344 = vld [vmem:[%s343] sm:$0x1]
    %s345 = scalar_lea.vmem [#allocation1], 103
    %v346 = vld [vmem:[%s345] sm:$0x2]
    %vm347 = vcmask 1041409
    %v348 = vsel %vm347, %v346, %v344
    %s349 = scalar_lea.vmem [#allocation1], 166
    %v350 = vld [vmem:[%s349] sm:$0x4]
    %vm351 = vcmask 1042434
    %v352 = vsel %vm351, %v350, %v348
    %s353 = scalar_lea.vmem [#allocation1], 229
    %v354 = vld [vmem:[%s353] sm:$0x8]
    %vm355 = vcmask 1043459
    %v356 = vsel %vm355, %v354, %v352
    %357 = vrot.lane.b32.xlu0 %v356, 80
    %v358 = vpop.permute.xlu0 %357
    %vm359 = vcmask 687744
    %360 = vst.msk [vmem:[#allocation0] ss:$8 sm:$0xf] %vm359, %v358
    %s361 = scalar_lea.vmem [#allocation1], 35
    %v362 = vld [vmem:[%s361] sm:$0x1]
    %s363 = scalar_lea.vmem [#allocation1], 98
    %v364 = vld [vmem:[%s363] sm:$0x2]
    %vm365 = vcmask 1041409
    %v366 = vsel %vm365, %v364, %v362
    %s367 = scalar_lea.vmem [#allocation1], 161
    %v368 = vld [vmem:[%s367] sm:$0x4]
    %vm369 = vcmask 1042434
    %v370 = vsel %vm369, %v368, %v366
    %s371 = scalar_lea.vmem [#allocation1], 224
    %v372 = vld [vmem:[%s371] sm:$0x8]
    %vm373 = vcmask 1043459
    %v374 = vsel %vm373, %v372, %v370
    %375 = vrot.lane.b32.xlu0 %v374, 76
    %v376 = vpop.permute.xlu0 %375
    %vm377 = vcmask 654944
    %378 = vst.msk [vmem:[#allocation0] ss:$8 sm:$0xf] %vm377, %v376
    %s379 = scalar_lea.vmem [#allocation1], 34
    %v380 = vld [vmem:[%s379] sm:$0x1]
    %s381 = scalar_lea.vmem [#allocation1], 97
    %v382 = vld [vmem:[%s381] sm:$0x2]
    %vm383 = vcmask 1041409
    %v384 = vsel %vm383, %v382, %v380
    %s385 = scalar_lea.vmem [#allocation1], 160
    %v386 = vld [vmem:[%s385] sm:$0x4]
    %vm387 = vcmask 1042434
    %v388 = vsel %vm387, %v386, %v384
    %s389 = scalar_lea.vmem [#allocation1], 223
    %v390 = vld [vmem:[%s389] sm:$0x8]
    %vm391 = vcmask 1043459
    %v392 = vsel %vm391, %v390, %v388
    %393 = vrot.lane.b32.xlu0 %v392, 72
    %v394 = vpop.permute.xlu0 %393
    %vm395 = vcmask 622144
    %396 = vst.msk [vmem:[#allocation0] ss:$8 sm:$0xf] %vm395, %v394
    %s397 = scalar_lea.vmem [#allocation1], 33
    %v398 = vld [vmem:[%s397] sm:$0x1]
    %s399 = scalar_lea.vmem [#allocation1], 96
    %v400 = vld [vmem:[%s399] sm:$0x2]
    %vm401 = vcmask 1041409
    %v402 = vsel %vm401, %v400, %v398
    %s403 = scalar_lea.vmem [#allocation1], 159
    %v404 = vld [vmem:[%s403] sm:$0x4]
    %vm405 = vcmask 1042434
    %v406 = vsel %vm405, %v404, %v402
    %s407 = scalar_lea.vmem [#allocation1], 222
    %v408 = vld [vmem:[%s407] sm:$0x8]
    %vm409 = vcmask 1043459
    %v410 = vsel %vm409, %v408, %v406
    %411 = vrot.lane.b32.xlu0 %v410, 68
    %v412 = vpop.permute.xlu0 %411
    %vm413 = vcmask 589344
    %414 = vst.msk [vmem:[#allocation0] ss:$8 sm:$0xf] %vm413, %v412
    %s415 = scalar_lea.vmem [#allocation1], 32
    %v416 = vld [vmem:[%s415] sm:$0x1]
    %s417 = scalar_lea.vmem [#allocation1], 95
    %v418 = vld [vmem:[%s417] sm:$0x2]
    %vm419 = vcmask 1041409
    %v420 = vsel %vm419, %v418, %v416
    %s421 = scalar_lea.vmem [#allocation1], 158
    %v422 = vld [vmem:[%s421] sm:$0x4]
    %vm423 = vcmask 1042434
    %v424 = vsel %vm423, %v422, %v420
    %s425 = scalar_lea.vmem [#allocation1], 221
    %v426 = vld [vmem:[%s425] sm:$0x8]
    %vm427 = vcmask 1043459
    %v428 = vsel %vm427, %v426, %v424
    %429 = vrot.lane.b32.xlu0 %v428, 64
    %v430 = vpop.permute.xlu0 %429
    %vm431 = vcmask 556544
    %432 = vst.msk [vmem:[#allocation0] ss:$8 sm:$0xf] %vm431, %v430
    %s433 = scalar_lea.vmem [#allocation1], 27
    %v434 = vld [vmem:[%s433] sm:$0x1]
    %s435 = scalar_lea.vmem [#allocation1], 90
    %v436 = vld [vmem:[%s435] sm:$0x2]
    %vm437 = vcmask 1041409
    %v438 = vsel %vm437, %v436, %v434
    %s439 = scalar_lea.vmem [#allocation1], 153
    %v440 = vld [vmem:[%s439] sm:$0x4]
    %vm441 = vcmask 1042434
    %v442 = vsel %vm441, %v440, %v438
    %s443 = scalar_lea.vmem [#allocation1], 216
    %v444 = vld [vmem:[%s443] sm:$0x8]
    %vm445 = vcmask 1043459
    %v446 = vsel %vm445, %v444, %v442
    %447 = vrot.lane.b32.xlu0 %v446, 60
    %v448 = vpop.permute.xlu0 %447
    %vm449 = vcmask 523744
    %450 = vst.msk [vmem:[#allocation0] ss:$8 sm:$0xf] %vm449, %v448
    %s451 = scalar_lea.vmem [#allocation1], 26
    %v452 = vld [vmem:[%s451] sm:$0x1]
    %s453 = scalar_lea.vmem [#allocation1], 89
    %v454 = vld [vmem:[%s453] sm:$0x2]
    %vm455 = vcmask 1041409
    %v456 = vsel %vm455, %v454, %v452
    %s457 = scalar_lea.vmem [#allocation1], 152
    %v458 = vld [vmem:[%s457] sm:$0x4]
    %vm459 = vcmask 1042434
    %v460 = vsel %vm459, %v458, %v456
    %s461 = scalar_lea.vmem [#allocation1], 215
    %v462 = vld [vmem:[%s461] sm:$0x8]
    %vm463 = vcmask 1043459
    %v464 = vsel %vm463, %v462, %v460
    %465 = vrot.lane.b32.xlu0 %v464, 56
    %v466 = vpop.permute.xlu0 %465
    %vm467 = vcmask 490944
    %468 = vst.msk [vmem:[#allocation0] ss:$8 sm:$0xf] %vm467, %v466
    %s469 = scalar_lea.vmem [#allocation1], 25
    %v470 = vld [vmem:[%s469] sm:$0x1]
    %s471 = scalar_lea.vmem [#allocation1], 88
    %v472 = vld [vmem:[%s471] sm:$0x2]
    %vm473 = vcmask 1041409
    %v474 = vsel %vm473, %v472, %v470
    %s475 = scalar_lea.vmem [#allocation1], 151
    %v476 = vld [vmem:[%s475] sm:$0x4]
    %vm477 = vcmask 1042434
    %v478 = vsel %vm477, %v476, %v474
    %s479 = scalar_lea.vmem [#allocation1], 214
    %v480 = vld [vmem:[%s479] sm:$0x8]
    %vm481 = vcmask 1043459
    %v482 = vsel %vm481, %v480, %v478
    %483 = vrot.lane.b32.xlu0 %v482, 52
    %v484 = vpop.permute.xlu0 %483
    %vm485 = vcmask 458144
    %486 = vst.msk [vmem:[#allocation0] ss:$8 sm:$0xf] %vm485, %v484
    %s487 = scalar_lea.vmem [#allocation1], 24
    %v488 = vld [vmem:[%s487] sm:$0x1]
    %s489 = scalar_lea.vmem [#allocation1], 87
    %v490 = vld [vmem:[%s489] sm:$0x2]
    %vm491 = vcmask 1041409
    %v492 = vsel %vm491, %v490, %v488
    %s493 = scalar_lea.vmem [#allocation1], 150
    %v494 = vld [vmem:[%s493] sm:$0x4]
    %vm495 = vcmask 1042434
    %v496 = vsel %vm495, %v494, %v492
    %s497 = scalar_lea.vmem [#allocation1], 213
    %v498 = vld [vmem:[%s497] sm:$0x8]
    %vm499 = vcmask 1043459
    %v500 = vsel %vm499, %v498, %v496
    %501 = vrot.lane.b32.xlu0 %v500, 48
    %v502 = vpop.permute.xlu0 %501
    %vm503 = vcmask 425344
    %504 = vst.msk [vmem:[#allocation0] ss:$8 sm:$0xf] %vm503, %v502
    %s505 = scalar_lea.vmem [#allocation1], 19
    %v506 = vld [vmem:[%s505] sm:$0x1]
    %s507 = scalar_lea.vmem [#allocation1], 82
    %v508 = vld [vmem:[%s507] sm:$0x2]
    %vm509 = vcmask 1041409
    %v510 = vsel %vm509, %v508, %v506
    %s511 = scalar_lea.vmem [#allocation1], 145
    %v512 = vld [vmem:[%s511] sm:$0x4]
    %vm513 = vcmask 1042434
    %v514 = vsel %vm513, %v512, %v510
    %s515 = scalar_lea.vmem [#allocation1], 208
    %v516 = vld [vmem:[%s515] sm:$0x8]
    %vm517 = vcmask 1043459
    %v518 = vsel %vm517, %v516, %v514
    %519 = vrot.lane.b32.xlu0 %v518, 44
    %v520 = vpop.permute.xlu0 %519
    %vm521 = vcmask 392544
    %522 = vst.msk [vmem:[#allocation0] ss:$8 sm:$0xf] %vm521, %v520
    %s523 = scalar_lea.vmem [#allocation1], 18
    %v524 = vld [vmem:[%s523] sm:$0x1]
    %s525 = scalar_lea.vmem [#allocation1], 81
    %v526 = vld [vmem:[%s525] sm:$0x2]
    %vm527 = vcmask 1041409
    %v528 = vsel %vm527, %v526, %v524
    %s529 = scalar_lea.vmem [#allocation1], 144
    %v530 = vld [vmem:[%s529] sm:$0x4]
    %vm531 = vcmask 1042434
    %v532 = vsel %vm531, %v530, %v528
    %s533 = scalar_lea.vmem [#allocation1], 207
    %v534 = vld [vmem:[%s533] sm:$0x8]
    %vm535 = vcmask 1043459
    %v536 = vsel %vm535, %v534, %v532
    %537 = vrot.lane.b32.xlu0 %v536, 40
    %v538 = vpop.permute.xlu0 %537
    %vm539 = vcmask 359744
    %540 = vst.msk [vmem:[#allocation0] ss:$8 sm:$0xf] %vm539, %v538
    %s541 = scalar_lea.vmem [#allocation1], 17
    %v542 = vld [vmem:[%s541] sm:$0x1]
    %s543 = scalar_lea.vmem [#allocation1], 80
    %v544 = vld [vmem:[%s543] sm:$0x2]
    %vm545 = vcmask 1041409
    %v546 = vsel %vm545, %v544, %v542
    %s547 = scalar_lea.vmem [#allocation1], 143
    %v548 = vld [vmem:[%s547] sm:$0x4]
    %vm549 = vcmask 1042434
    %v550 = vsel %vm549, %v548, %v546
    %s551 = scalar_lea.vmem [#allocation1], 206
    %v552 = vld [vmem:[%s551] sm:$0x8]
    %vm553 = vcmask 1043459
    %v554 = vsel %vm553, %v552, %v550
    %555 = vrot.lane.b32.xlu0 %v554, 36
    %v556 = vpop.permute.xlu0 %555
    %vm557 = vcmask 326944
    %558 = vst.msk [vmem:[#allocation0] ss:$8 sm:$0xf] %vm557, %v556
    %s559 = scalar_lea.vmem [#allocation1], 16
    %v560 = vld [vmem:[%s559] sm:$0x1]
    %s561 = scalar_lea.vmem [#allocation1], 79
    %v562 = vld [vmem:[%s561] sm:$0x2]
    %vm563 = vcmask 1041409
    %v564 = vsel %vm563, %v562, %v560
    %s565 = scalar_lea.vmem [#allocation1], 142
    %v566 = vld [vmem:[%s565] sm:$0x4]
    %vm567 = vcmask 1042434
    %v568 = vsel %vm567, %v566, %v564
    %s569 = scalar_lea.vmem [#allocation1], 205
    %v570 = vld [vmem:[%s569] sm:$0x8]
    %vm571 = vcmask 1043459
    %v572 = vsel %vm571, %v570, %v568
    %573 = vrot.lane.b32.xlu0 %v572, 32
    %v574 = vpop.permute.xlu0 %573
    %vm575 = vcmask 294144
    %576 = vst.msk [vmem:[#allocation0] ss:$8 sm:$0xf] %vm575, %v574
    %s577 = scalar_lea.vmem [#allocation1], 11
    %v578 = vld [vmem:[%s577] sm:$0x1]
    %s579 = scalar_lea.vmem [#allocation1], 74
    %v580 = vld [vmem:[%s579] sm:$0x2]
    %vm581 = vcmask 1041409
    %v582 = vsel %vm581, %v580, %v578
    %s583 = scalar_lea.vmem [#allocation1], 137
    %v584 = vld [vmem:[%s583] sm:$0x4]
    %vm585 = vcmask 1042434
    %v586 = vsel %vm585, %v584, %v582
    %s587 = scalar_lea.vmem [#allocation1], 200
    %v588 = vld [vmem:[%s587] sm:$0x8]
    %vm589 = vcmask 1043459
    %v590 = vsel %vm589, %v588, %v586
    %591 = vrot.lane.b32.xlu0 %v590, 28
    %v592 = vpop.permute.xlu0 %591
    %vm593 = vcmask 261344
    %594 = vst.msk [vmem:[#allocation0] ss:$8 sm:$0xf] %vm593, %v592
    %s595 = scalar_lea.vmem [#allocation1], 10
    %v596 = vld [vmem:[%s595] sm:$0x1]
    %s597 = scalar_lea.vmem [#allocation1], 73
    %v598 = vld [vmem:[%s597] sm:$0x2]
    %vm599 = vcmask 1041409
    %v600 = vsel %vm599, %v598, %v596
    %s601 = scalar_lea.vmem [#allocation1], 136
    %v602 = vld [vmem:[%s601] sm:$0x4]
    %vm603 = vcmask 1042434
    %v604 = vsel %vm603, %v602, %v600
    %s605 = scalar_lea.vmem [#allocation1], 199
    %v606 = vld [vmem:[%s605] sm:$0x8]
    %vm607 = vcmask 1043459
    %v608 = vsel %vm607, %v606, %v604
    %609 = vrot.lane.b32.xlu0 %v608, 24
    %v610 = vpop.permute.xlu0 %609
    %vm611 = vcmask 228544
    %612 = vst.msk [vmem:[#allocation0] ss:$8 sm:$0xf] %vm611, %v610
    %s613 = scalar_lea.vmem [#allocation1], 9
    %v614 = vld [vmem:[%s613] sm:$0x1]
    %s615 = scalar_lea.vmem [#allocation1], 72
    %v616 = vld [vmem:[%s615] sm:$0x2]
    %vm617 = vcmask 1041409
    %v618 = vsel %vm617, %v616, %v614
    %s619 = scalar_lea.vmem [#allocation1], 135
    %v620 = vld [vmem:[%s619] sm:$0x4]
    %vm621 = vcmask 1042434
    %v622 = vsel %vm621, %v620, %v618
    %s623 = scalar_lea.vmem [#allocation1], 198
    %v624 = vld [vmem:[%s623] sm:$0x8]
    %vm625 = vcmask 1043459
    %v626 = vsel %vm625, %v624, %v622
    %627 = vrot.lane.b32.xlu0 %v626, 20
    %v628 = vpop.permute.xlu0 %627
    %vm629 = vcmask 195744
    %630 = vst.msk [vmem:[#allocation0] ss:$8 sm:$0xf] %vm629, %v628
    %s631 = scalar_lea.vmem [#allocation1], 8
    %v632 = vld [vmem:[%s631] sm:$0x1]
    %s633 = scalar_lea.vmem [#allocation1], 71
    %v634 = vld [vmem:[%s633] sm:$0x2]
    %vm635 = vcmask 1041409
    %v636 = vsel %vm635, %v634, %v632
    %s637 = scalar_lea.vmem [#allocation1], 134
    %v638 = vld [vmem:[%s637] sm:$0x4]
    %vm639 = vcmask 1042434
    %v640 = vsel %vm639, %v638, %v636
    %s641 = scalar_lea.vmem [#allocation1], 197
    %v642 = vld [vmem:[%s641] sm:$0x8]
    %vm643 = vcmask 1043459
    %v644 = vsel %vm643, %v642, %v640
    %645 = vrot.lane.b32.xlu0 %v644, 16
    %v646 = vpop.permute.xlu0 %645
    %vm647 = vcmask 162944
    %648 = vst.msk [vmem:[#allocation0] ss:$8 sm:$0xf] %vm647, %v646
    %s649 = scalar_lea.vmem [#allocation1], 3
    %v650 = vld [vmem:[%s649] sm:$0x1]
    %s651 = scalar_lea.vmem [#allocation1], 66
    %v652 = vld [vmem:[%s651] sm:$0x2]
    %vm653 = vcmask 1041409
    %v654 = vsel %vm653, %v652, %v650
    %s655 = scalar_lea.vmem [#allocation1], 129
    %v656 = vld [vmem:[%s655] sm:$0x4]
    %vm657 = vcmask 1042434
    %v658 = vsel %vm657, %v656, %v654
    %s659 = scalar_lea.vmem [#allocation1], 192
    %v660 = vld [vmem:[%s659] sm:$0x8]
    %vm661 = vcmask 1043459
    %v662 = vsel %vm661, %v660, %v658
    %663 = vrot.lane.b32.xlu0 %v662, 12
    %v664 = vpop.permute.xlu0 %663
    %vm665 = vcmask 130144
    %666 = vst.msk [vmem:[#allocation0] ss:$8 sm:$0xf] %vm665, %v664
    %s667 = scalar_lea.vmem [#allocation1], 2
    %v668 = vld [vmem:[%s667] sm:$0x1]
    %s669 = scalar_lea.vmem [#allocation1], 65
    %v670 = vld [vmem:[%s669] sm:$0x2]
    %vm671 = vcmask 1041409
    %v672 = vsel %vm671, %v670, %v668
    %s673 = scalar_lea.vmem [#allocation1], 128
    %v674 = vld [vmem:[%s673] sm:$0x4]
    %vm675 = vcmask 1042434
    %v676 = vsel %vm675, %v674, %v672
    %s677 = scalar_lea.vmem [#allocation1], 191
    %v678 = vld [vmem:[%s677] sm:$0x8]
    %vm679 = vcmask 1043459
    %v680 = vsel %vm679, %v678, %v676
    %681 = vrot.lane.b32.xlu0 %v680, 8
    %v682 = vpop.permute.xlu0 %681
    %vm683 = vcmask 97344
    %684 = vst.msk [vmem:[#allocation0] ss:$8 sm:$0xf] %vm683, %v682
    %s685 = scalar_lea.vmem [#allocation1], 1
    %v686 = vld [vmem:[%s685] sm:$0x1]
    %s687 = scalar_lea.vmem [#allocation1], 64
    %v688 = vld [vmem:[%s687] sm:$0x2]
    %vm689 = vcmask 1041409
    %v690 = vsel %vm689, %v688, %v686
    %s691 = scalar_lea.vmem [#allocation1], 127
    %v692 = vld [vmem:[%s691] sm:$0x4]
    %vm693 = vcmask 1042434
    %v694 = vsel %vm693, %v692, %v690
    %s695 = scalar_lea.vmem [#allocation1], 190
    %v696 = vld [vmem:[%s695] sm:$0x8]
    %vm697 = vcmask 1043459
    %v698 = vsel %vm697, %v696, %v694
    %699 = vrot.lane.b32.xlu0 %v698, 4
    %v700 = vpop.permute.xlu0 %699
    %vm701 = vcmask 64544
    %702 = vst.msk [vmem:[#allocation0] ss:$8 sm:$0xf] %vm701, %v700
    %s704 = ssub.s32 2, 1
    %v705 = vld [vmem:[#allocation0] sm:%s704]
    %s707 = ssub.s32 2, 1
    %708 = vst [vmem:[%s1] sm:%s707] %v705
    %s709 = scalar_lea.vmem [#allocation0], 8
    %v710 = vld [vmem:[%s709] sm:%s704]
    %s712 = ssub.s32 2, 1
    %s713 = scalar_lea.vmem %s1, 1
    %714 = vst [vmem:[%s713] sm:%s712] %v710
    %s715 = scalar_lea.vmem [#allocation0], 16
    %v716 = vld [vmem:[%s715] sm:%s704]
    %s718 = ssub.s32 2, 1
    %s719 = scalar_lea.vmem %s1, 2
    %720 = vst [vmem:[%s719] sm:%s718] %v716
    %s721 = scalar_lea.vmem [#allocation0], 24
    %v722 = vld [vmem:[%s721] sm:%s704]
    %s724 = ssub.s32 2, 1
    %s725 = scalar_lea.vmem %s1, 3
    %726 = vst [vmem:[%s725] sm:%s724] %v722

// kernel: fourier_layer.1
$region0: #{fourier_layer.1}
  #allocation0 [shape = 'u32[]', space=smem, size = 0x4, offset = 0x4, fixed_abs, tag = 'smem constant byte address 0x4 - core index']
  #allocation1 [shape = 'u32[72,128]{1,0:T(1,128)}', space=vmem, size = 0x9000, scoped, tag = 'internal scratch']
  %s0 = inlined_call_operand.vmem [shape: f32[1,512], index: 0, kind: input, shape index: {}]
  %s1 = inlined_call_operand.vmem [shape: f32[1,512], index: 1, kind: input, shape index: {}]
  %s2 = inlined_call_operand.vmem [shape: f32[1,512], index: 2, kind: input, shape index: {}]
  %s3 = inlined_call_operand.vmem [shape: f32[1,512], index: 3, kind: input, shape index: {}]
  %s4 = inlined_call_operand.vmem [shape: f32[2,512], index: 4, kind: input, shape index: {}]
  %s5 = inlined_call_operand.vmem [shape: f32[2,512], index: 5, kind: input, shape index: {}]
  %s6 = inlined_call_operand.vmem [shape: f32[2,512], index: 6, kind: input, shape index: {}]
  %s7 = inlined_call_operand.vmem [shape: f32[2,512], index: 7, kind: input, shape index: {}]
  %s8 = inlined_call_operand.vmem [shape: f32[2,512], index: 8, kind: output, shape index: {0}]
  %s9 = inlined_call_operand.vmem [shape: f32[2,512], index: 9, kind: output, shape index: {1}]
  %s10 = inlined_call_operand.vmem [shape: f32[2,512], index: 10, kind: output, shape index: {2}]
  %s11 = inlined_call_operand.vmem [shape: f32[2,512], index: 11, kind: output, shape index: {3}]
  %12 = xla_tuple %s8, %s9, %s10, %s11
  %s13 = sld [smem:[#allocation0]]
  $region66: #{fourier_layer.1} parent=0
    _
  %s15 = ssub.s32 1, %s13
  %s16 = scalar_select 0, %s15, %s13
  // Predicated region
  $region2: #{fourier_layer.1} parent=0 // pred_check
    _
  $region3: #{fourier_layer.1} parent=0 // pred_check_branch
    %18 = sbr.rel (0) target = $region5
  $region4: #{fourier_layer.1} parent=0 // pred_region
    _
  $region5: #{fourier_layer.1} parent=0 // pred_fallthru
    _
  // Predicated region
  $region6: #{fourier_layer.1} parent=0 // pred_check
    _
  $region7: #{fourier_layer.1} parent=0 // pred_check_branch
    %20 = sbr.rel (0) target = $region9
  $region8: #{fourier_layer.1} parent=0 // pred_region
    _
  $region9: #{fourier_layer.1} parent=0 // pred_fallthru
    _
  // Predicated region
  $region10: #{fourier_layer.1} parent=0 // pred_check
    _
  $region11: #{fourier_layer.1} parent=0 // pred_check_branch
    %22 = sbr.rel (0) target = $region13
  $region12: #{fourier_layer.1} parent=0 // pred_region
    _
  $region13: #{fourier_layer.1} parent=0 // pred_fallthru
    _
  // Predicated region
  $region14: #{fourier_layer.1} parent=0 // pred_check
    _
  $region15: #{fourier_layer.1} parent=0 // pred_check_branch
    %24 = sbr.rel (0) target = $region17
  $region16: #{fourier_layer.1} parent=0 // pred_region
    _
  $region17: #{fourier_layer.1} parent=0 // pred_fallthru
    _
  // Predicated region
  $region18: #{fourier_layer.1} parent=0 // pred_check
    _
  $region19: #{fourier_layer.1} parent=0 // pred_check_branch
    %26 = sbr.rel (0) target = $region21
  $region20: #{fourier_layer.1} parent=0 // pred_region
    _
  $region21: #{fourier_layer.1} parent=0 // pred_fallthru
    _
  // Predicated region
  $region22: #{fourier_layer.1} parent=0 // pred_check
    _
  $region23: #{fourier_layer.1} parent=0 // pred_check_branch
    %28 = sbr.rel (0) target = $region25
  $region24: #{fourier_layer.1} parent=0 // pred_region
    _
  $region25: #{fourier_layer.1} parent=0 // pred_fallthru
    _
  // Predicated region
  $region26: #{fourier_layer.1} parent=0 // pred_check
    _
  $region27: #{fourier_layer.1} parent=0 // pred_check_branch
    %30 = sbr.rel (0) target = $region29
  $region28: #{fourier_layer.1} parent=0 // pred_region
    _
  $region29: #{fourier_layer.1} parent=0 // pred_fallthru
    _
  // Predicated region
  $region30: #{fourier_layer.1} parent=0 // pred_check
    _
  $region31: #{fourier_layer.1} parent=0 // pred_check_branch
    %32 = sbr.rel (0) target = $region33
  $region32: #{fourier_layer.1} parent=0 // pred_region
    _
  $region33: #{fourier_layer.1} parent=0 // pred_fallthru
    _
  %v33 = vld [vmem:[%s0] sm:$0xf]
  %v34 = vld [vmem:[%s1] sm:$0xf]
  %v35 = vld [vmem:[%s2] sm:$0xf]
  %v36 = vld [vmem:[%s3] sm:$0xf]
  %v37 = vld [vmem:[%s4] sm:$0xff]
  %v38 = vld [vmem:[%s5] sm:$0xff]
  %v40 = vperm.slane %v33, 0
  %v41 = vperm.slane %v33, 1
  %v42 = vperm.slane %v33, 2
  %v43 = vperm.slane %v33, 3
  %v44 = vrot.slane %v41, 6
  %v45 = vrot.slane %v42, 4
  %v46 = vrot.slane %v43, 2
  %vm47 = vcmask 1041408
  %v48 = vsel %vm47, %v40, %v44
  %vm49 = vcmask 1045508
  %v50 = vsel %vm49, %v45, %v46
  %vm51 = vcmask 1043456
  %v52 = vsel %vm51, %v48, %v50
  %v54 = vmul.f32 %v37, %v52
  %v56 = vperm.slane %v34, 0
  %v57 = vperm.slane %v34, 1
  %v58 = vperm.slane %v34, 2
  %v59 = vperm.slane %v34, 3
  %v60 = vrot.slane %v57, 6
  %v61 = vrot.slane %v58, 4
  %v62 = vrot.slane %v59, 2
  %v63 = vsel %vm47, %v56, %v60
  %v64 = vsel %vm49, %v61, %v62
  %v65 = vsel %vm51, %v63, %v64
  %v67 = vmul.f32 %v38, %v65
  %v68 = vsub.f32 %v54, %v67
  %69 = vst [vmem:[%s8] sm:$0xff] %v68
  %v70 = vmul.f32 %v37, %v65
  %v71 = vmul.f32 %v38, %v52
  %v72 = vadd.f32 %v70, %v71
  %73 = vst [vmem:[%s9] sm:$0xff] %v72
  %v74 = vld [vmem:[%s6] sm:$0xff]
  %v75 = vld [vmem:[%s7] sm:$0xff]
  %v77 = vperm.slane %v35, 0
  %v78 = vperm.slane %v35, 1
  %v79 = vperm.slane %v35, 2
  %v80 = vperm.slane %v35, 3
  %v81 = vrot.slane %v78, 6
  %v82 = vrot.slane %v79, 4
  %v83 = vrot.slane %v80, 2
  %v84 = vsel %vm47, %v77, %v81
  %v85 = vsel %vm49, %v82, %v83
  %v86 = vsel %vm51, %v84, %v85
  %v88 = vmul.f32 %v74, %v86
  %v90 = vperm.slane %v36, 0
  %v91 = vperm.slane %v36, 1
  %v92 = vperm.slane %v36, 2
  %v93 = vperm.slane %v36, 3
  %v94 = vrot.slane %v91, 6
  %v95 = vrot.slane %v92, 4
  %v96 = vrot.slane %v93, 2
  %v97 = vsel %vm47, %v90, %v94
  %v98 = vsel %vm49, %v95, %v96
  %v99 = vsel %vm51, %v97, %v98
  %v101 = vmul.f32 %v75, %v99
  %v102 = vsub.f32 %v88, %v101
  %103 = vst [vmem:[%s10] sm:$0xff] %v102
  %v104 = vmul.f32 %v74, %v99
  %v105 = vmul.f32 %v75, %v86
  %v106 = vadd.f32 %v104, %v105
  %107 = vst [vmem:[%s11] sm:$0xff] %v106
  // Predicated region
  $region34: #{fourier_layer.1} parent=0 // pred_check
    _
  $region35: #{fourier_layer.1} parent=0 // pred_check_branch
    %109 = sbr.rel (0) target = $region37
  $region36: #{fourier_layer.1} parent=0 // pred_region
    _
  $region37: #{fourier_layer.1} parent=0 // pred_fallthru
    _
  // Predicated region
  $region38: #{fourier_layer.1} parent=0 // pred_check
    _
  $region39: #{fourier_layer.1} parent=0 // pred_check_branch
    %111 = sbr.rel (0) target = $region41
  $region40: #{fourier_layer.1} parent=0 // pred_region
    _
  $region41: #{fourier_layer.1} parent=0 // pred_fallthru
    _
  // Predicated region
  $region42: #{fourier_layer.1} parent=0 // pred_check
    _
  $region43: #{fourier_layer.1} parent=0 // pred_check_branch
    %113 = sbr.rel (0) target = $region45
  $region44: #{fourier_layer.1} parent=0 // pred_region
    _
  $region45: #{fourier_layer.1} parent=0 // pred_fallthru
    _
  // Predicated region
  $region46: #{fourier_layer.1} parent=0 // pred_check
    _
  $region47: #{fourier_layer.1} parent=0 // pred_check_branch
    %115 = sbr.rel (0) target = $region49
  $region48: #{fourier_layer.1} parent=0 // pred_region
    _
  $region49: #{fourier_layer.1} parent=0 // pred_fallthru
    _
  // Predicated region
  $region50: #{fourier_layer.1} parent=0 // pred_check
    _
  $region51: #{fourier_layer.1} parent=0 // pred_check_branch
    %117 = sbr.rel (0) target = $region53
  $region52: #{fourier_layer.1} parent=0 // pred_region
    _
  $region53: #{fourier_layer.1} parent=0 // pred_fallthru
    _
  // Predicated region
  $region54: #{fourier_layer.1} parent=0 // pred_check
    _
  $region55: #{fourier_layer.1} parent=0 // pred_check_branch
    %119 = sbr.rel (0) target = $region57
  $region56: #{fourier_layer.1} parent=0 // pred_region
    _
  $region57: #{fourier_layer.1} parent=0 // pred_fallthru
    _
  // Predicated region
  $region58: #{fourier_layer.1} parent=0 // pred_check
    _
  $region59: #{fourier_layer.1} parent=0 // pred_check_branch
    %121 = sbr.rel (0) target = $region61
  $region60: #{fourier_layer.1} parent=0 // pred_region
    _
  $region61: #{fourier_layer.1} parent=0 // pred_fallthru
    _
  // Predicated region
  $region62: #{fourier_layer.1} parent=0 // pred_check
    _
  $region63: #{fourier_layer.1} parent=0 // pred_check_branch
    %123 = sbr.rel (0) target = $region65
  $region64: #{fourier_layer.1} parent=0 // pred_region
    _
  $region65: #{fourier_layer.1} parent=0 // pred_fallthru
    _

// kernel: reverse.1
$region0: #{reverse.1}
  #allocation0 [shape = 's32[1]{0}', space=sflag, size = 0x4, scoped, tag = 'scoped memory for reverse.1']
  %s0 = inlined_call_operand.vmem [shape: f32[2,32,16,7], index: 0, kind: input, shape index: {}]
  %s1 = inlined_call_operand.vmem [shape: f32[2,32,16,7], index: 1, kind: output, shape index: {}]
  %s2 = scalar_lea.vmem %s0, 96
  %v3 = vld [vmem:[%s2] sm:$0xff]
  %4 = vst [vmem:[%s1] sm:$0xff] %v3
  %s5 = scalar_lea.vmem %s0, 208
  %v6 = vld [vmem:[%s5] sm:$0xff]
  %s7 = scalar_lea.vmem %s1, 112
  %8 = vst [vmem:[%s7] sm:$0xff] %v6
  %s9 = scalar_lea.vmem %s0, 80
  %v10 = vld [vmem:[%s9] sm:$0xff]
  %s11 = scalar_lea.vmem %s1, 16
  %12 = vst [vmem:[%s11] sm:$0xff] %v10
  %s13 = scalar_lea.vmem %s0, 192
  %v14 = vld [vmem:[%s13] sm:$0xff]
  %s15 = scalar_lea.vmem %s1, 128
  %16 = vst [vmem:[%s15] sm:$0xff] %v14
  %s17 = scalar_lea.vmem %s0, 64
  %v18 = vld [vmem:[%s17] sm:$0xff]
  %s19 = scalar_lea.vmem %s1, 32
  %20 = vst [vmem:[%s19] sm:$0xff] %v18
  %s21 = scalar_lea.vmem %s0, 176
  %v22 = vld [vmem:[%s21] sm:$0xff]
  %s23 = scalar_lea.vmem %s1, 144
  %24 = vst [vmem:[%s23] sm:$0xff] %v22
  %s25 = scalar_lea.vmem %s0, 48
  %v26 = vld [vmem:[%s25] sm:$0xff]
  %s27 = scalar_lea.vmem %s1, 48
  %28 = vst [vmem:[%s27] sm:$0xff] %v26
  %s29 = scalar_lea.vmem %s0, 160
  %v30 = vld [vmem:[%s29] sm:$0xff]
  %s31 = scalar_lea.vmem %s1, 160
  %32 = vst [vmem:[%s31] sm:$0xff] %v30
  %s33 = scalar_lea.vmem %s0, 32
  %v34 = vld [vmem:[%s33] sm:$0xff]
  %s35 = scalar_lea.vmem %s1, 64
  %36 = vst [vmem:[%s35] sm:$0xff] %v34
  %s37 = scalar_lea.vmem %s0, 144
  %v38 = vld [vmem:[%s37] sm:$0xff]
  %s39 = scalar_lea.vmem %s1, 176
  %40 = vst [vmem:[%s39] sm:$0xff] %v38
  %s41 = scalar_lea.vmem %s0, 16
  %v42 = vld [vmem:[%s41] sm:$0xff]
  %s43 = scalar_lea.vmem %s1, 80
  %44 = vst [vmem:[%s43] sm:$0xff] %v42
  %s45 = scalar_lea.vmem %s0, 128
  %v46 = vld [vmem:[%s45] sm:$0xff]
  %s47 = scalar_lea.vmem %s1, 192
  %48 = vst [vmem:[%s47] sm:$0xff] %v46
  %v49 = vld [vmem:[%s0] sm:$0xff]
  %s50 = scalar_lea.vmem %s1, 96
  %51 = vst [vmem:[%s50] sm:$0xff] %v49
  %s52 = scalar_lea.vmem %s0, 112
  %v53 = vld [vmem:[%s52] sm:$0xff]
  %s54 = scalar_lea.vmem %s1, 208
  %55 = vst [vmem:[%s54] sm:$0xff] %v53
  %s56 = scalar_lea.vmem %s0, 104
  %v57 = vld [vmem:[%s56] sm:$0xff]
  %s58 = scalar_lea.vmem %s1, 8
  %59 = vst [vmem:[%s58] sm:$0xff] %v57
  %s60 = scalar_lea.vmem %s0, 216
  %v61 = vld [vmem:[%s60] sm:$0xff]
  %s62 = scalar_lea.vmem %s1, 120
  %63 = vst [vmem:[%s62] sm:$0xff] %v61
  %s64 = scalar_lea.vmem %s0, 88
  %v65 = vld [vmem:[%s64] sm:$0xff]
  %s66 = scalar_lea.vmem %s1, 24
  %67 = vst [vmem:[%s66] sm:$0xff] %v65
  %s68 = scalar_lea.vmem %s0, 200
  %v69 = vld [vmem:[%s68] sm:$0xff]
  %s70 = scalar_lea.vmem %s1, 136
  %71 = vst [vmem:[%s70] sm:$0xff] %v69
  %s72 = scalar_lea.vmem %s0, 72
  %v73 = vld [vmem:[%s72] sm:$0xff]
  %s74 = scalar_lea.vmem %s1, 40
  %75 = vst [vmem:[%s74] sm:$0xff] %v73
  %s76 = scalar_lea.vmem %s0, 184
  %v77 = vld [vmem:[%s76] sm:$0xff]
  %s78 = scalar_lea.vmem %s1, 152
  %79 = vst [vmem:[%s78] sm:$0xff] %v77
  %s80 = scalar_lea.vmem %s0, 56
  %v81 = vld [vmem:[%s80] sm:$0xff]
  %s82 = scalar_lea.vmem %s1, 56
  %83 = vst [vmem:[%s82] sm:$0xff] %v81
  %s84 = scalar_lea.vmem %s0, 168
  %v85 = vld [vmem:[%s84] sm:$0xff]
  %s86 = scalar_lea.vmem %s1, 168
  %87 = vst [vmem:[%s86] sm:$0xff] %v85
  %s88 = scalar_lea.vmem %s0, 40
  %v89 = vld [vmem:[%s88] sm:$0xff]
  %s90 = scalar_lea.vmem %s1, 72
  %91 = vst [vmem:[%s90] sm:$0xff] %v89
  %s92 = scalar_lea.vmem %s0, 152
  %v93 = vld [vmem:[%s92] sm:$0xff]
  %s94 = scalar_lea.vmem %s1, 184
  %95 = vst [vmem:[%s94] sm:$0xff] %v93
  %s96 = scalar_lea.vmem %s0, 24
  %v97 = vld [vmem:[%s96] sm:$0xff]
  %s98 = scalar_lea.vmem %s1, 88
  %99 = vst [vmem:[%s98] sm:$0xff] %v97
  %s100 = scalar_lea.vmem %s0, 136
  %v101 = vld [vmem:[%s100] sm:$0xff]
  %s102 = scalar_lea.vmem %s1, 200
  %103 = vst [vmem:[%s102] sm:$0xff] %v101
  %s104 = scalar_lea.vmem %s0, 8
  %v105 = vld [vmem:[%s104] sm:$0xff]
  %s106 = scalar_lea.vmem %s1, 104
  %107 = vst [vmem:[%s106] sm:$0xff] %v105
  %s108 = scalar_lea.vmem %s0, 120
  %v109 = vld [vmem:[%s108] sm:$0xff]
  %s110 = scalar_lea.vmem %s1, 216
  %111 = vst [vmem:[%s110] sm:$0xff] %v109

</llo_original>
